<compile_context>
chip_gen: v5e
topology: v5e:2x2
jax: 0.10.0
libtpu: 0.0.40
codegen_flags: <defaults>
</compile_context>

<pallas_src>
import jax
import jax.numpy as jnp
from jax.experimental import pallas as pl
from jax.experimental.pallas import tpu as pltpu

EPS = 1e-5
NEG_SLOPE = 0.2


def _round_up(x, m):
    return (x + m - 1) // m * m


def _pick_tile_h(h, w, target_hw=256):
    """Largest divisor of h with tile_h * w near target_hw (sublane aligned)."""
    want = max(1, min(h, target_hw // max(w, 1)))
    for th in range(want, 0, -1):
        if h % th == 0 and (th == h or (th * w) % 8 == 0):
            return th
    return h


def _pick_coutp(cout):
    # Lane-dense (multiple-of-128) stores only when padding overhead is <= 2x; otherwise
    # keep the true channel count (masked stores beat 16x HBM write amplification).
    c128 = _round_up(cout, 128)
    return c128 if c128 <= 2 * cout else cout


def _vmem_limit(block_bytes_total):
    # Pipelined blocks are double-buffered by default; add headroom for compiler scratch.
    need = 2 * block_bytes_total + (8 << 20)
    # 96 MiB cap is fine for v5e/v6e (128 MiB physical). TODO(synk): cap ~48 MiB on v7x.
    return int(min(max(need, 32 << 20), 96 << 20))


def _make_conv_stats_kernel(*, tile_h, width, k, c3p, coutp):
    tile_hw = tile_h * width

    def kernel(x_ref, w_ref, conv_ref, sum_ref, ssq_ref):
        # x_ref   : (1, H+2p, W, c3p)   padded, kw-folded sample (resident per sample)
        # w_ref   : (K, c3p, Coutp)     constant weights
        # conv_ref: (1, tile_hw, Coutp) un-normalized conv tile (streamed out)
        # sum_ref : (1, 1, Coutp)       per-sample per-channel sum (resident accumulator)
        # ssq_ref : (1, 1, Coutp)       per-sample per-channel sum of squares
        j = pl.program_id(1)

        @pl.when(j == 0)
        def _init():
            sum_ref[...] = jnp.zeros_like(sum_ref)
            ssq_ref[...] = jnp.zeros_like(ssq_ref)

        row0 = j * tile_h
        acc = jnp.zeros((tile_hw, coutp), jnp.float32)
        for kh in range(k):
            # Full-width, full-channel row slab -> contiguous: reshape is a free view.
            patch = x_ref[0, pl.ds(row0 + kh, tile_h), :, :].reshape(tile_hw, c3p)
            acc = acc + jnp.dot(patch, w_ref[kh],
                                preferred_element_type=jnp.float32)

        conv_ref[...] = acc[None].astype(conv_ref.dtype)
        # Per-channel statistics from the f32 accumulator (XLU sublane reductions).
        sum_ref[...] += acc.sum(axis=0, keepdims=True)[None]
        ssq_ref[...] += (acc * acc).sum(axis=0, keepdims=True)[None]

    return kernel


def _make_norm_kernel(*, hw):
    inv_n = 1.0 / float(hw)

    def kernel(conv_ref, sum_ref, ssq_ref, o_ref):
        mean = sum_ref[...] * inv_n                                  # (1, 1, Coutp)
        var = jnp.maximum(ssq_ref[...] * inv_n - mean * mean, 0.0)
        inv_std = jax.lax.rsqrt(var + EPS)
        y = (conv_ref[...].astype(jnp.float32) - mean) * inv_std
        o_ref[...] = jnp.where(y >= 0.0, y, NEG_SLOPE * y).astype(o_ref.dtype)

    return kernel


def conv_block(x, weight, *, tile_h=None, compute_dtype=jnp.bfloat16):
    """x: (N, Cin, H, W) f32; weight: (Cout, Cin, K, K) f32 -> (N, Cout, H, W) f32."""
    n, cin, h, w = x.shape
    cout, cin_w, k, k2 = weight.shape
    assert cin_w == cin and k == k2
    pad = k // 2

    if tile_h is None:
        tile_h = _pick_tile_h(h, w)
    assert h % tile_h == 0, "H must be divisible by tile_h"
    n_tiles = h // tile_h
    tile_hw = tile_h * w
    assert n_tiles == 1 or tile_hw % 8 == 0, "tile rows must be sublane (8) aligned"
    # Contiguous per-tap views need (W, channels) row slabs with no sublane padding.
    assert w % 8 == 0, "W must be a multiple of 8"  # TODO(synk): relax via relayout path

    hw = h * w
    hp = h + 2 * pad
    c3 = k * cin
    c3p = _round_up(c3, 8)
    coutp = _pick_coutp(cout)
    itemsize = jnp.dtype(compute_dtype).itemsize

    # --- wrapper layout pass: NCHW -> NHWC, pad halo, fold kw taps into channels. ---
    x_nhwc = jnp.transpose(x, (0, 2, 3, 1))                            # (N, H, W, Cin)
    x_p = jnp.pad(x_nhwc, ((0, 0), (pad, pad), (pad, pad), (0, 0)))    # (N, Hp, Wp, Cin)
    x_fold = jnp.concatenate([x_p[:, :, kw:kw + w, :] for kw in range(k)], axis=-1)
    x_fold = jnp.pad(x_fold, ((0, 0), (0, 0), (0, 0), (0, c3p - c3)))
    x_fold = x_fold.astype(compute_dtype)                              # (N, Hp, W, c3p)

    # weight (Cout,Cin,K,K) -> (K, K*Cin, Cout) with channel order kw*Cin+ci (matches fold).
    w_mat = jnp.transpose(weight, (2, 3, 1, 0)).reshape(k, k * cin, cout)
    w_mat = jnp.pad(w_mat, ((0, 0), (0, c3p - c3), (0, coutp - cout)))
    w_mat = w_mat.astype(compute_dtype)

    # ---------------- pass 1: conv + per-channel statistics ----------------
    conv_kernel = _make_conv_stats_kernel(tile_h=tile_h, width=w, k=k,
                                          c3p=c3p, coutp=coutp)
    blocks_a = (hp * w * c3p * itemsize          # resident padded sample
                + k * c3p * coutp * itemsize     # weights
                + tile_hw * coutp * itemsize     # streamed conv tile
                + 2 * coutp * 4)                 # stats
    conv_out, s_out, q_out = pl.pallas_call(
        conv_kernel,
        out_shape=(jax.ShapeDtypeStruct((n, hw, coutp), compute_dtype),
                   jax.ShapeDtypeStruct((n, 1, coutp), jnp.float32),
                   jax.ShapeDtypeStruct((n, 1, coutp), jnp.float32)),
        grid_spec=pltpu.PrefetchScalarGridSpec(
            num_scalar_prefetch=0,
            grid=(n, n_tiles),
            in_specs=[
                # Padded, kw-folded sample: constant block index across the tile axis,
                # so it is DMA'd once per sample and stays resident in VMEM.
                pl.BlockSpec((1, hp, w, c3p), lambda i, j: (i, 0, 0, 0)),
                # Weights: constant block, never re-DMA'd.
                pl.BlockSpec((k, c3p, coutp), lambda i, j: (0, 0, 0)),
            ],
            out_specs=[
                pl.BlockSpec((1, tile_hw, coutp), lambda i, j: (i, j, 0)),
                pl.BlockSpec((1, 1, coutp), lambda i, j: (i, 0, 0)),
                pl.BlockSpec((1, 1, coutp), lambda i, j: (i, 0, 0)),
            ],
        ),
        compiler_params=pltpu.CompilerParams(
            dimension_semantics=("parallel", "arbitrary"),
            vmem_limit_bytes=_vmem_limit(blocks_a),
        ),
    )(x_fold, w_mat)

    # -------- pass 2: InstanceNorm + LeakyReLU, streamed through the pipeline --------
    norm_kernel = _make_norm_kernel(hw=hw)
    blocks_b = tile_hw * coutp * (itemsize + 4) + 2 * coutp * 4
    out = pl.pallas_call(
        norm_kernel,
        out_shape=jax.ShapeDtypeStruct((n, hw, coutp), jnp.float32),
        grid_spec=pltpu.PrefetchScalarGridSpec(
            num_scalar_prefetch=0,
            grid=(n, n_tiles),
            in_specs=[
                pl.BlockSpec((1, tile_hw, coutp), lambda i, j: (i, j, 0)),
                pl.BlockSpec((1, 1, coutp), lambda i, j: (i, 0, 0)),
                pl.BlockSpec((1, 1, coutp), lambda i, j: (i, 0, 0)),
            ],
            out_specs=pl.BlockSpec((1, tile_hw, coutp), lambda i, j: (i, j, 0)),
        ),
        compiler_params=pltpu.CompilerParams(
            dimension_semantics=("parallel", "parallel"),
            vmem_limit_bytes=_vmem_limit(blocks_b),
        ),
    )(conv_out, s_out, q_out)

    out = out[:, :, :cout].reshape(n, h, w, cout)
    return jnp.transpose(out, (0, 3, 1, 2))


def _reference(x, weight):
    # Plain-JAX reference matching the PyTorch module.
    y = jax.lax.conv_general_dilated(
        x, weight, window_strides=(1, 1), padding=((1, 1), (1, 1)),
        dimension_numbers=("NCHW", "OIHW", "NCHW"))
    mean = y.mean(axis=(2, 3), keepdims=True)
    var = ((y - mean) ** 2).mean(axis=(2, 3), keepdims=True)
    y = (y - mean) * jax.lax.rsqrt(var + EPS)
    return jnp.where(y >= 0.0, y, NEG_SLOPE * y)


if __name__ == "__main__":
    key = jax.random.PRNGKey(0)
    kx, kw_key = jax.random.split(key)

    N, Cin, Cout, H, W, K = 2, 4, 8, 16, 16, 3
    x = jax.random.normal(kx, (N, Cin, H, W), dtype=jnp.float32)
    weight = jax.random.normal(kw_key, (Cout, Cin, K, K), dtype=jnp.float32) * 0.1

    ref = _reference(x, weight)

    # Exact-ish path (f32 MXU inputs + f32 intermediate): tight tolerance.
    out32 = jax.block_until_ready(conv_block(x, weight, compute_dtype=jnp.float32))
    assert out32.shape == (N, Cout, H, W)
    assert jnp.allclose(out32, ref, atol=5e-4, rtol=5e-4), \
        float(jnp.max(jnp.abs(out32 - ref)))

    # Fast path (bf16 MXU inputs + bf16 intermediate, f32 accumulation / f32 norm math).
    out16 = jax.block_until_ready(conv_block(x, weight, compute_dtype=jnp.bfloat16))
    assert out16.shape == (N, Cout, H, W)
    assert jnp.allclose(out16, ref, atol=5e-2, rtol=5e-2), \
        float(jnp.max(jnp.abs(out16 - ref)))

    print("KERNEL_OK")
</pallas_src>

<mosaic_0001>
module attributes {stable_mosaic.version = 11 : i64} {
  func.func @kernel(%arg0: i32, %arg1: i32, %arg2: memref<1x18x16x16xf32, #tpu.memory_space<vmem>>, %arg3: memref<3x16x8xf32, #tpu.memory_space<vmem>>, %arg4: memref<1x256x8xf32, #tpu.memory_space<vmem>>, %arg5: memref<1x1x8xf32, #tpu.memory_space<vmem>>, %arg6: memref<1x1x8xf32, #tpu.memory_space<vmem>>) attributes {dimension_semantics = [#tpu.dimension_semantics<parallel>, #tpu.dimension_semantics<arbitrary>], iteration_bounds = array<i64: 2, 1>, scalar_prefetch = 0 : i64, scratch_operands = 0 : i64, tpu.core_type = #tpu.core_type<tc>, window_params = [{transform_indices = @transform_0, window_bounds = array<i64: 1, 18, 16, 16>}, {pipeline_mode = #tpu.pipeline_mode<synchronous>, transform_indices = @transform_1, window_bounds = array<i64: 3, 16, 8>}, {transform_indices = @transform_2, window_bounds = array<i64: 1, 256, 8>}, {transform_indices = @transform_3, window_bounds = array<i64: 1, 1, 8>}, {transform_indices = @transform_4, window_bounds = array<i64: 1, 1, 8>}]} {
    %c0_i32 = arith.constant 0 : i32
    %0 = arith.cmpi eq, %arg1, %c0_i32 : i32
    %1 = arith.extui %0 : i1 to i32
    %c0_i32_0 = arith.constant 0 : i32
    %2 = arith.cmpi ne, %1, %c0_i32_0 : i32
    scf.if %2 {
      %cst_37 = arith.constant 0.000000e+00 : f32
      %47 = vector.broadcast %cst_37 : f32 to vector<1x1x8xf32>
      %c0_38 = arith.constant 0 : index
      %c0_39 = arith.constant 0 : index
      %c0_40 = arith.constant 0 : index
      %48 = vector.load %arg5[%c0_38, %c0_39, %c0_40] : memref<1x1x8xf32, #tpu.memory_space<vmem>>, vector<1x1x8xf32>
      tpu.vector_store %arg5[%c0_38, %c0_39, %c0_40], %47 {strides = array<i32>} : memref<1x1x8xf32, #tpu.memory_space<vmem>>, vector<1x1x8xf32>,
      %cst_41 = arith.constant 0.000000e+00 : f32
      %49 = vector.broadcast %cst_41 : f32 to vector<1x1x8xf32>
      %c0_42 = arith.constant 0 : index
      %c0_43 = arith.constant 0 : index
      %c0_44 = arith.constant 0 : index
      %50 = vector.load %arg6[%c0_42, %c0_43, %c0_44] : memref<1x1x8xf32, #tpu.memory_space<vmem>>, vector<1x1x8xf32>
      tpu.vector_store %arg6[%c0_42, %c0_43, %c0_44], %49 {strides = array<i32>} : memref<1x1x8xf32, #tpu.memory_space<vmem>>, vector<1x1x8xf32>,
    } else {
    }
    %c16_i32 = arith.constant 16 : i32
    %3 = arith.muli %arg1, %c16_i32 : i32
    %cst = arith.constant 0.000000e+00 : f32
    %4 = vector.broadcast %cst : f32 to vector<256x8xf32>
    %c0_i32_1 = arith.constant 0 : i32
    %5 = arith.addi %3, %c0_i32_1 : i32
    %c0 = arith.constant 0 : index
    %6 = arith.index_cast %5 : i32 to index
    %c0_2 = arith.constant 0 : index
    %c0_3 = arith.constant 0 : index
    %7 = vector.load %arg2[%c0, %6, %c0_2, %c0_3] : memref<1x18x16x16xf32, #tpu.memory_space<vmem>>, vector<1x16x16x16xf32>
    %8 = vector.shape_cast %7 : vector<1x16x16x16xf32> to vector<16x16x16xf32>
    %9 = vector.shape_cast %8 : vector<16x16x16xf32> to vector<256x16xf32>
    %c0_4 = arith.constant 0 : index
    %c0_5 = arith.constant 0 : index
    %c0_6 = arith.constant 0 : index
    %10 = vector.load %arg3[%c0_4, %c0_5, %c0_6] : memref<3x16x8xf32, #tpu.memory_space<vmem>>, vector<1x16x8xf32>
    %11 = vector.shape_cast %10 : vector<1x16x8xf32> to vector<16x8xf32>
    %cst_7 = arith.constant dense<0.000000e+00> : vector<256x8xf32>
    %12 = tpu.matmul %9, %11, %cst_7 {dimension_numbers = #tpu.dot_dimension_numbers<[1], [0], [0], [1], [0, 0, 1, 1], [], []>} : vector<256x16xf32>, vector<16x8xf32>, vector<256x8xf32> -> vector<256x8xf32>
    %13 = arith.addf %4, %12 : vector<256x8xf32>
    %c1_i32 = arith.constant 1 : i32
    %14 = arith.addi %3, %c1_i32 : i32
    %c0_8 = arith.constant 0 : index
    %15 = arith.index_cast %14 : i32 to index
    %c0_9 = arith.constant 0 : index
    %c0_10 = arith.constant 0 : index
    %16 = vector.load %arg2[%c0_8, %15, %c0_9, %c0_10] : memref<1x18x16x16xf32, #tpu.memory_space<vmem>>, vector<1x16x16x16xf32>
    %17 = vector.shape_cast %16 : vector<1x16x16x16xf32> to vector<16x16x16xf32>
    %18 = vector.shape_cast %17 : vector<16x16x16xf32> to vector<256x16xf32>
    %c1 = arith.constant 1 : index
    %c0_11 = arith.constant 0 : index
    %c0_12 = arith.constant 0 : index
    %19 = vector.load %arg3[%c1, %c0_11, %c0_12] : memref<3x16x8xf32, #tpu.memory_space<vmem>>, vector<1x16x8xf32>
    %20 = vector.shape_cast %19 : vector<1x16x8xf32> to vector<16x8xf32>
    %cst_13 = arith.constant dense<0.000000e+00> : vector<256x8xf32>
    %21 = tpu.matmul %18, %20, %cst_13 {dimension_numbers = #tpu.dot_dimension_numbers<[1], [0], [0], [1], [0, 0, 1, 1], [], []>} : vector<256x16xf32>, vector<16x8xf32>, vector<256x8xf32> -> vector<256x8xf32>
    %22 = arith.addf %13, %21 : vector<256x8xf32>
    %c2_i32 = arith.constant 2 : i32
    %23 = arith.addi %3, %c2_i32 : i32
    %c0_14 = arith.constant 0 : index
    %24 = arith.index_cast %23 : i32 to index
    %c0_15 = arith.constant 0 : index
    %c0_16 = arith.constant 0 : index
    %25 = vector.load %arg2[%c0_14, %24, %c0_15, %c0_16] : memref<1x18x16x16xf32, #tpu.memory_space<vmem>>, vector<1x16x16x16xf32>
    %26 = vector.shape_cast %25 : vector<1x16x16x16xf32> to vector<16x16x16xf32>
    %27 = vector.shape_cast %26 : vector<16x16x16xf32> to vector<256x16xf32>
    %c2 = arith.constant 2 : index
    %c0_17 = arith.constant 0 : index
    %c0_18 = arith.constant 0 : index
    %28 = vector.load %arg3[%c2, %c0_17, %c0_18] : memref<3x16x8xf32, #tpu.memory_space<vmem>>, vector<1x16x8xf32>
    %29 = vector.shape_cast %28 : vector<1x16x8xf32> to vector<16x8xf32>
    %cst_19 = arith.constant dense<0.000000e+00> : vector<256x8xf32>
    %30 = tpu.matmul %27, %29, %cst_19 {dimension_numbers = #tpu.dot_dimension_numbers<[1], [0], [0], [1], [0, 0, 1, 1], [], []>} : vector<256x16xf32>, vector<16x8xf32>, vector<256x8xf32> -> vector<256x8xf32>
    %31 = arith.addf %22, %30 : vector<256x8xf32>
    %32 = vector.shape_cast %31 : vector<256x8xf32> to vector<1x256x8xf32>
    %c0_20 = arith.constant 0 : index
    %c0_21 = arith.constant 0 : index
    %c0_22 = arith.constant 0 : index
    %33 = vector.load %arg4[%c0_20, %c0_21, %c0_22] : memref<1x256x8xf32, #tpu.memory_space<vmem>>, vector<1x256x8xf32>
    tpu.vector_store %arg4[%c0_20, %c0_21, %c0_22], %32 {strides = array<i32>} : memref<1x256x8xf32, #tpu.memory_space<vmem>>, vector<1x256x8xf32>,
    %c0_23 = arith.constant 0 : index
    %c0_24 = arith.constant 0 : index
    %c0_25 = arith.constant 0 : index
    %34 = vector.load %arg5[%c0_23, %c0_24, %c0_25] : memref<1x1x8xf32, #tpu.memory_space<vmem>>, vector<1x1x8xf32>
    %cst_26 = arith.constant dense<0.000000e+00> : vector<8xf32>
    %35 = vector.multi_reduction <add>, %31, %cst_26 [0] : vector<256x8xf32> to vector<8xf32>
    %36 = vector.shape_cast %35 : vector<8xf32> to vector<1x8xf32>
    %37 = vector.shape_cast %36 : vector<1x8xf32> to vector<1x1x8xf32>
    %38 = arith.addf %34, %37 : vector<1x1x8xf32>
    %c0_27 = arith.constant 0 : index
    %c0_28 = arith.constant 0 : index
    %c0_29 = arith.constant 0 : index
    %39 = vector.load %arg5[%c0_27, %c0_28, %c0_29] : memref<1x1x8xf32, #tpu.memory_space<vmem>>, vector<1x1x8xf32>
    tpu.vector_store %arg5[%c0_27, %c0_28, %c0_29], %38 {strides = array<i32>} : memref<1x1x8xf32, #tpu.memory_space<vmem>>, vector<1x1x8xf32>,
    %c0_30 = arith.constant 0 : index
    %c0_31 = arith.constant 0 : index
    %c0_32 = arith.constant 0 : index
    %40 = vector.load %arg6[%c0_30, %c0_31, %c0_32] : memref<1x1x8xf32, #tpu.memory_space<vmem>>, vector<1x1x8xf32>
    %41 = arith.mulf %31, %31 : vector<256x8xf32>
    %cst_33 = arith.constant dense<0.000000e+00> : vector<8xf32>
    %42 = vector.multi_reduction <add>, %41, %cst_33 [0] : vector<256x8xf32> to vector<8xf32>
    %43 = vector.shape_cast %42 : vector<8xf32> to vector<1x8xf32>
    %44 = vector.shape_cast %43 : vector<1x8xf32> to vector<1x1x8xf32>
    %45 = arith.addf %40, %44 : vector<1x1x8xf32>
    %c0_34 = arith.constant 0 : index
    %c0_35 = arith.constant 0 : index
    %c0_36 = arith.constant 0 : index
    %46 = vector.load %arg6[%c0_34, %c0_35, %c0_36] : memref<1x1x8xf32, #tpu.memory_space<vmem>>, vector<1x1x8xf32>
    tpu.vector_store %arg6[%c0_34, %c0_35, %c0_36], %45 {strides = array<i32>} : memref<1x1x8xf32, #tpu.memory_space<vmem>>, vector<1x1x8xf32>,
    return
  }
  func.func @transform_0(%arg0: i32, %arg1: i32) -> (i32, i32, i32, i32) {
    %c0_i32 = arith.constant 0 : i32
    %c0_i32_0 = arith.constant 0 : i32
    %c0_i32_1 = arith.constant 0 : i32
    %c0_i32_2 = arith.constant 0 : i32
    return %arg0, %c0_i32, %c0_i32_0, %c0_i32_1 : i32, i32, i32, i32
  }
  func.func @transform_1(%arg0: i32, %arg1: i32) -> (i32, i32, i32) {
    %c0_i32 = arith.constant 0 : i32
    %c0_i32_0 = arith.constant 0 : i32
    %c0_i32_1 = arith.constant 0 : i32
    %c0_i32_2 = arith.constant 0 : i32
    return %c0_i32, %c0_i32_0, %c0_i32_1 : i32, i32, i32
  }
  func.func @transform_2(%arg0: i32, %arg1: i32) -> (i32, i32, i32) {
    %c0_i32 = arith.constant 0 : i32
    %c0_i32_0 = arith.constant 0 : i32
    return %arg0, %arg1, %c0_i32 : i32, i32, i32
  }
  func.func @transform_3(%arg0: i32, %arg1: i32) -> (i32, i32, i32) {
    %c0_i32 = arith.constant 0 : i32
    %c0_i32_0 = arith.constant 0 : i32
    %c0_i32_1 = arith.constant 0 : i32
    return %arg0, %c0_i32, %c0_i32_0 : i32, i32, i32
  }
  func.func @transform_4(%arg0: i32, %arg1: i32) -> (i32, i32, i32) {
    %c0_i32 = arith.constant 0 : i32
    %c0_i32_0 = arith.constant 0 : i32
    %c0_i32_1 = arith.constant 0 : i32
    return %arg0, %c0_i32, %c0_i32_0 : i32, i32, i32
  }
}

</mosaic_0001>

<llo_original>
// kernel: tpu_custom_call.1
$region0: #{tpu_custom_call.1}
  #allocation0 [shape = 'u32[]', space=smem, size = 0x4, offset = 0x4, fixed_abs, tag = 'smem constant byte address 0x4 - core index']
  #allocation1 [shape = 'u32[72,128]{1,0:T(1,128)}', space=vmem, size = 0x9000, scoped, tag = 'internal scratch']
  %s0 = inlined_call_operand.vmem [shape: f32[2,18,16,16], index: 0, kind: input, shape index: {}]
  %s1 = inlined_call_operand.vmem [shape: f32[3,16,8], index: 1, kind: input, shape index: {}]
  %s2 = inlined_call_operand.vmem [shape: f32[2,256,8], index: 2, kind: output, shape index: {0}]
  %s3 = inlined_call_operand.hbm [shape: f32[2,1,8], index: 3, kind: output, shape index: {1}]
  %s4 = inlined_call_operand.hbm [shape: f32[2,1,8], index: 4, kind: output, shape index: {2}]
  %5 = xla_tuple %s2, %s3, %s4
  %s6 = sld [smem:[#allocation0]]
  $region61: #{tpu_custom_call.1} parent=0
    _
  %s8 = ssub.s32 1, %s6
  %s9 = scalar_select 0, %s8, %s6
  $region1: #{tpu_custom_call.1} parent=0
    #allocation2 [shape = 'u8[1024]{0}', space=vmem, size = 0x400, scoped, tag = 'output window, operand 1']
    #allocation3 [shape = 's32[2]{0}', space=sflag, size = 0x8, scoped, tag = 'scoped memory for tpu_custom_call.1']
    #allocation4 [shape = 'u8[1024]{0}', space=vmem, size = 0x400, scoped, tag = 'output window, operand 2']
    #allocation5 [shape = 's32[2]{0}', space=sflag, size = 0x8, scoped, tag = 'scoped memory for tpu_custom_call.1']
    %10 = vsyncpa [#allocation3], 0
    %s11 = scalar_lea.sflag [#allocation3], 1
    %12 = vsyncpa %s11, 0
    %13 = vsyncpa [#allocation5], 0
    %s14 = scalar_lea.sflag [#allocation5], 1
    %15 = vsyncpa %s14, 0
    loop: start=0, step=1, limit=4
    $region2: #{tpu_custom_call.1} parent=1 // loop_pre_header
      _
    $region3: #{tpu_custom_call.1} parent=1 // loop_header
      %s17 = sphi 0, %s21
      %p18 = scmp.ge.s32.totalorder %s17, 4
      %s24 = sphi 0, %s36
      %s25 = sphi 0, %s32
      %s26 = sphi 0, %s24
      %s27 = sphi 0, %s25
      %s28 = sphi 0, %s26
      %s29 = sphi 0, %s27
      %s39 = sphi 0, %s41
      %s42 = sphi 0, %s39
      %s43 = sphi 0, %s42
      %s59 = sphi 0, %s43
      %s63 = sphi 0, %s63
      %s65 = sphi 0, %s63
      %s66 = sphi 0, %s65
      %s80 = sphi 0, %s66
      %s88 = sphi 0, %s90
      %s91 = sphi 0, %s88
      %s92 = sphi 0, %s91
      %s108 = sphi 0, %s92
      %s114 = sphi 0, %s116
      %s117 = sphi 0, %s114
      %s118 = sphi 0, %s117
      %s134 = sphi 0, %s118
      %s140 = sphi 0, %s142
      %s143 = sphi 0, %s140
      %s144 = sphi 0, %s143
      %s160 = sphi 0, %s144
    $region4: #{tpu_custom_call.1} parent=1 // loop_header_branch
      %20 = sbr.rel (%p18) target = $region8
    $region5: #{tpu_custom_call.1} parent=1 // loop_body
      %s22 = ssub.s32 %s17, 1
      %s23 = ssub.s32 %s17, 2
      %s30 = sadd.s32 1, %s25
      %p31 = scmp.ge.s32.totalorder %s30, 1
      %s32 = scalar_select %p31, 0, %s30
      %s33 = sadd.s32 1, %s24
      %s34 = scalar_select %p31, %s33, %s24
      %p35 = scmp.ge.s32.totalorder %s34, 2
      %s36 = scalar_select %p35, 0, %s34
      %s37 = ssub.s32 %s24, %s36
      %p38 = scmp.eq.s32.totalorder %s37, 0
      %s40 = sadd.s32 %s39, 1
      %s41 = scalar_select %p38, %s39, %s40
      %p44 = pneg %p38
      %p45 = scmp.eq.s32.totalorder %s17, 1
      %p46 = por %p44, %p45
      %p47 = scmp.ne.s32.totalorder %s39, %s42
      %p48 = scmp.eq.s32.totalorder %s17, 0
      %p49 = por %p47, %p48
      %p50 = scmp.ne.s32.totalorder %s39, %s42
      %p51 = scmp.eq.s32.totalorder %s22, 1
      %p52 = por %p50, %p51
      %p53 = scmp.ne.s32.totalorder %s42, %s43
      %p54 = scmp.eq.s32.totalorder %s22, 0
      %p55 = por %p53, %p54
      %p56 = scmp.ne.s32.totalorder %s42, %s43
      %p57 = scmp.eq.s32.totalorder %s23, 1
      %p58 = por %p56, %p57
      %p60 = scmp.ne.s32.totalorder %s43, %s59
      %p61 = scmp.eq.s32.totalorder %s23, 0
      %p62 = por %p60, %p61
      %s64 = sadd.s32 %s63, 1
      %p67 = scmp.eq.s32.totalorder %s17, 1
      %p68 = scmp.ne.s32.totalorder %s63, %s65
      %p69 = scmp.eq.s32.totalorder %s17, 0
      %p70 = por %p68, %p69
      %p71 = scmp.ne.s32.totalorder %s63, %s65
      %p72 = scmp.eq.s32.totalorder %s22, 1
      %p73 = por %p71, %p72
      %p74 = scmp.ne.s32.totalorder %s65, %s66
      %p75 = scmp.eq.s32.totalorder %s22, 0
      %p76 = por %p74, %p75
      %p77 = scmp.ne.s32.totalorder %s65, %s66
      %p78 = scmp.eq.s32.totalorder %s23, 1
      %p79 = por %p77, %p78
      %p81 = scmp.ne.s32.totalorder %s66, %s80
      %p82 = scmp.eq.s32.totalorder %s23, 0
      %p83 = por %p81, %p82
      %s84 = ssub.s32 %s24, %s36
      %s85 = ssub.s32 %s25, %s32
      %s86 = sor.u32 %s84, %s85
      %p87 = scmp.eq.s32.totalorder %s86, 0
      %s89 = sadd.s32 %s88, 1
      %s90 = scalar_select %p87, %s88, %s89
      %p93 = pneg %p87
      %p94 = scmp.eq.s32.totalorder %s17, 1
      %p95 = por %p93, %p94
      %p96 = scmp.ne.s32.totalorder %s88, %s91
      %p97 = scmp.eq.s32.totalorder %s17, 0
      %p98 = por %p96, %p97
      %p99 = scmp.ne.s32.totalorder %s88, %s91
      %p100 = scmp.eq.s32.totalorder %s22, 1
      %p101 = por %p99, %p100
      %p102 = scmp.ne.s32.totalorder %s91, %s92
      %p103 = scmp.eq.s32.totalorder %s22, 0
      %p104 = por %p102, %p103
      %p105 = scmp.ne.s32.totalorder %s91, %s92
      %p106 = scmp.eq.s32.totalorder %s23, 1
      %p107 = por %p105, %p106
      %p109 = scmp.ne.s32.totalorder %s92, %s108
      %p110 = scmp.eq.s32.totalorder %s23, 0
      %p111 = por %p109, %p110
      %s112 = ssub.s32 %s24, %s36
      %p113 = scmp.eq.s32.totalorder %s112, 0
      %s115 = sadd.s32 %s114, 1
      %s116 = scalar_select %p113, %s114, %s115
      %p119 = pneg %p113
      %p120 = scmp.eq.s32.totalorder %s17, 1
      %p121 = por %p119, %p120
      %p122 = scmp.ne.s32.totalorder %s114, %s117
      %p123 = scmp.eq.s32.totalorder %s17, 0
      %p124 = por %p122, %p123
      %p125 = scmp.ne.s32.totalorder %s114, %s117
      %p126 = scmp.eq.s32.totalorder %s22, 1
      %p127 = por %p125, %p126
      %p128 = scmp.ne.s32.totalorder %s117, %s118
      %p129 = scmp.eq.s32.totalorder %s22, 0
      %p130 = por %p128, %p129
      %p131 = scmp.ne.s32.totalorder %s117, %s118
      %p132 = scmp.eq.s32.totalorder %s23, 1
      %p133 = por %p131, %p132
      %p135 = scmp.ne.s32.totalorder %s118, %s134
      %p136 = scmp.eq.s32.totalorder %s23, 0
      %p137 = por %p135, %p136
      %s138 = ssub.s32 %s24, %s36
      %p139 = scmp.eq.s32.totalorder %s138, 0
      %s141 = sadd.s32 %s140, 1
      %s142 = scalar_select %p139, %s140, %s141
      %p145 = pneg %p139
      %p146 = scmp.eq.s32.totalorder %s17, 1
      %p147 = por %p145, %p146
      %p148 = scmp.ne.s32.totalorder %s140, %s143
      %p149 = scmp.eq.s32.totalorder %s17, 0
      %p150 = por %p148, %p149
      %p151 = scmp.ne.s32.totalorder %s140, %s143
      %p152 = scmp.eq.s32.totalorder %s22, 1
      %p153 = por %p151, %p152
      %p154 = scmp.ne.s32.totalorder %s143, %s144
      %p155 = scmp.eq.s32.totalorder %s22, 0
      %p156 = por %p154, %p155
      %p157 = scmp.ne.s32.totalorder %s143, %s144
      %p158 = scmp.eq.s32.totalorder %s23, 1
      %p159 = por %p157, %p158
      %p161 = scmp.ne.s32.totalorder %s144, %s160
      %p162 = scmp.eq.s32.totalorder %s23, 0
      %p163 = por %p161, %p162
      %p164 = scmp.le.s32.totalorder 1, %s17
      %p165 = scmp.lt.s32.totalorder %s17, 3
      %p166 = pnand %p164, %p165
      %p167 = pneg %p166
      // Predicated region
      $region9: #{tpu_custom_call.1} parent=5 // pred_check
        _
      $region10: #{tpu_custom_call.1} parent=5 // pred_check_branch
        %169 = sbr.rel (%p166) target = $region12
      $region11: #{tpu_custom_call.1} parent=5 // pred_region
        %s170 = ssub.s32 %s17, 1
        // Predicated region
        $region13: #{tpu_custom_call.1} parent=11 // pred_check
          %p171 = pneg %p76
        $region14: #{tpu_custom_call.1} parent=11 // pred_check_branch
          %173 = sbr.rel (%p171) target = $region16
        $region15: #{tpu_custom_call.1} parent=11 // pred_region
          _
        $region16: #{tpu_custom_call.1} parent=11 // pred_fallthru
          _
      $region12: #{tpu_custom_call.1} parent=5 // pred_fallthru
        _
      %p174 = scmp.lt.s32.totalorder %s17, 2
      // Predicated region
      $region17: #{tpu_custom_call.1} parent=5 // pred_check
        %p175 = pneg %p174
      $region18: #{tpu_custom_call.1} parent=5 // pred_check_branch
        %177 = sbr.rel (%p175) target = $region20
      $region19: #{tpu_custom_call.1} parent=5 // pred_region
        // Predicated region
        $region21: #{tpu_custom_call.1} parent=19 // pred_check
          %p178 = pneg %p49
        $region22: #{tpu_custom_call.1} parent=19 // pred_check_branch
          %180 = sbr.rel (%p178) target = $region24
        $region23: #{tpu_custom_call.1} parent=19 // pred_region
          %p181 = scmp.lt.s32.totalorder %s24, 1
          %s182 = scalar_select %p181, %s24, 1
          %s183 = smul.addr %s182, 36
          %s184 = smul.addr %s183, 8
          %s185 = scalar_lea.vmem %s0, %s184
        $region24: #{tpu_custom_call.1} parent=19 // pred_fallthru
          _
      $region20: #{tpu_custom_call.1} parent=5 // pred_fallthru
        _
      %p186 = scmp.le.s32.totalorder 1, %s17
      %p187 = scmp.lt.s32.totalorder %s17, 3
      %p188 = pnand %p186, %p187
      %p189 = pneg %p188
      // Predicated region
      $region25: #{tpu_custom_call.1} parent=5 // pred_check
        _
      $region26: #{tpu_custom_call.1} parent=5 // pred_check_branch
        %191 = sbr.rel (%p188) target = $region28
      $region27: #{tpu_custom_call.1} parent=5 // pred_region
        %s192 = ssub.s32 %s17, 1
        %p193 = scmp.lt.s32.totalorder %s26, 1
        %s194 = scalar_select %p193, %s26, 1
        %s195 = smul.addr %s194, 36
        %s196 = smul.addr %s195, 8
        %s197 = scalar_lea.vmem %s0, %s196
        %p198 = pneg %p55
        %p199 = pneg %p52
        %p200 = pneg %p76
        %p201 = pneg %p73
        %p202 = pneg %p104
        %p203 = pneg %p101
        %s204 = smul.u32 32, %s27
        %p205 = scmp.lt.s32.totalorder %s26, 1
        %s206 = scalar_select %p205, %s26, 1
        %p207 = scmp.lt.s32.totalorder %s204, 31
        %s208 = scalar_select %p207, %s204, 31
        %s209 = smul.addr %s206, 32
        %s210 = sadd.s32 %s208, %s209
        %s211 = smul.addr %s210, 8
        %s212 = scalar_lea.vmem %s2, %s211
        %p213 = pneg %p130
        %p214 = pneg %p127
        %s215 = sand.u32 %s117, 1
        %s216 = scalar_lea.sflag [#allocation3], %s215
        %s217 = sand.u32 %s117, 1
        %s218 = scalar_lea.vmem [#allocation2], %s217
        %p219 = pneg %p156
        %p220 = pneg %p153
        %s221 = sand.u32 %s143, 1
        %s222 = scalar_lea.sflag [#allocation5], %s221
        %s223 = sand.u32 %s143, 1
        %s224 = scalar_lea.vmem [#allocation4], %s223
        %p225 = scmp.lt.s32.totalorder %s26, 1
        %s226 = scalar_select %p225, %s26, 1
        %s227 = smul.addr %s226, 36
        %s228 = smul.addr %s227, 8
        %s229 = scalar_lea.vmem %s0, %s228
        %s230 = smul.u32 32, %s27
        %p231 = scmp.lt.s32.totalorder %s26, 1
        %s232 = scalar_select %p231, %s26, 1
        %p233 = scmp.lt.s32.totalorder %s230, 31
        %s234 = scalar_select %p233, %s230, 31
        %s235 = smul.addr %s232, 32
        %s236 = sadd.s32 %s234, %s235
        %s237 = smul.addr %s236, 8
        %s238 = scalar_lea.vmem %s2, %s237
        %s239 = smul.u32 32, %s27
        %p240 = scmp.eq.s32.totalorder %s27, 0
        // Predicated region
        $region29: #{tpu_custom_call.1} parent=27 // pred_check
          %p241 = pneg %p240
        $region30: #{tpu_custom_call.1} parent=27 // pred_check_branch
          %243 = sbr.rel (%p241) target = $region32
        $region31: #{tpu_custom_call.1} parent=27 // pred_region
          %vm244 = vcmask 57344
          %245 = vst.msk [vmem:[%s218] sm:$0x1] %vm244, 0.0
          %246 = vst.msk [vmem:[%s224] sm:$0x1] %vm244, 0.0
        $region32: #{tpu_custom_call.1} parent=27 // pred_fallthru
          _
        %s247 = smul.u32 %s27, 16
        %s248 = smul.u32 %s247, 16
        %s249 = scalar_lea.vmem %s229, %s248
        %v250 = vld [vmem:[%s249] sm:$0xff]
        %v251 = vld [vmem:[%s249 + $0x8] sm:$0xff]
        %v252 = vld [vmem:[%s249 + $0x10] sm:$0xff]
        %v253 = vld [vmem:[%s249 + $0x18] sm:$0xff]
        %v254 = vld [vmem:[%s249 + $0x20] sm:$0xff]
        %v255 = vld [vmem:[%s249 + $0x28] sm:$0xff]
        %v256 = vld [vmem:[%s249 + $0x30] sm:$0xff]
        %v257 = vld [vmem:[%s249 + $0x38] sm:$0xff]
        %v258 = vld [vmem:[%s249 + $0x40] sm:$0xff]
        %v259 = vld [vmem:[%s249 + $0x48] sm:$0xff]
        %v260 = vld [vmem:[%s249 + $0x50] sm:$0xff]
        %v261 = vld [vmem:[%s249 + $0x58] sm:$0xff]
        %v262 = vld [vmem:[%s249 + $0x60] sm:$0xff]
        %v263 = vld [vmem:[%s249 + $0x68] sm:$0xff]
        %v264 = vld [vmem:[%s249 + $0x70] sm:$0xff]
        %v265 = vld [vmem:[%s249 + $0x78] sm:$0xff]
        %v266 = vld [vmem:[%s249 + $0x80] sm:$0xff]
        %v267 = vld [vmem:[%s249 + $0x88] sm:$0xff]
        %v268 = vld [vmem:[%s249 + $0x90] sm:$0xff]
        %v269 = vld [vmem:[%s249 + $0x98] sm:$0xff]
        %v270 = vld [vmem:[%s249 + $0xa0] sm:$0xff]
        %v271 = vld [vmem:[%s249 + $0xa8] sm:$0xff]
        %v272 = vld [vmem:[%s249 + $0xb0] sm:$0xff]
        %v273 = vld [vmem:[%s249 + $0xb8] sm:$0xff]
        %v274 = vld [vmem:[%s249 + $0xc0] sm:$0xff]
        %v275 = vld [vmem:[%s249 + $0xc8] sm:$0xff]
        %v276 = vld [vmem:[%s249 + $0xd0] sm:$0xff]
        %v277 = vld [vmem:[%s249 + $0xd8] sm:$0xff]
        %v278 = vld [vmem:[%s249 + $0xe0] sm:$0xff]
        %v279 = vld [vmem:[%s249 + $0xe8] sm:$0xff]
        %v280 = vld [vmem:[%s249 + $0xf0] sm:$0xff]
        %v281 = vld [vmem:[%s249 + $0xf8] sm:$0xff]
        %v282 = vld [vmem:[%s1] sm:$0xff]
        %v283 = vld [vmem:[%s1 + $0x8] sm:$0xff]
        %s284 = sadd.s32 %s247, 1
        %s285 = smul.u32 %s284, 16
        %s286 = scalar_lea.vmem %s229, %s285
        %v287 = vld [vmem:[%s286] sm:$0xff]
        %v288 = vld [vmem:[%s286 + $0x8] sm:$0xff]
        %v289 = vld [vmem:[%s286 + $0x10] sm:$0xff]
        %v290 = vld [vmem:[%s286 + $0x18] sm:$0xff]
        %v291 = vld [vmem:[%s286 + $0x20] sm:$0xff]
        %v292 = vld [vmem:[%s286 + $0x28] sm:$0xff]
        %v293 = vld [vmem:[%s286 + $0x30] sm:$0xff]
        %v294 = vld [vmem:[%s286 + $0x38] sm:$0xff]
        %v295 = vld [vmem:[%s286 + $0x40] sm:$0xff]
        %v296 = vld [vmem:[%s286 + $0x48] sm:$0xff]
        %v297 = vld [vmem:[%s286 + $0x50] sm:$0xff]
        %v298 = vld [vmem:[%s286 + $0x58] sm:$0xff]
        %v299 = vld [vmem:[%s286 + $0x60] sm:$0xff]
        %v300 = vld [vmem:[%s286 + $0x68] sm:$0xff]
        %v301 = vld [vmem:[%s286 + $0x70] sm:$0xff]
        %v302 = vld [vmem:[%s286 + $0x78] sm:$0xff]
        %v303 = vld [vmem:[%s286 + $0x80] sm:$0xff]
        %v304 = vld [vmem:[%s286 + $0x88] sm:$0xff]
        %v305 = vld [vmem:[%s286 + $0x90] sm:$0xff]
        %v306 = vld [vmem:[%s286 + $0x98] sm:$0xff]
        %v307 = vld [vmem:[%s286 + $0xa0] sm:$0xff]
        %v308 = vld [vmem:[%s286 + $0xa8] sm:$0xff]
        %v309 = vld [vmem:[%s286 + $0xb0] sm:$0xff]
        %v310 = vld [vmem:[%s286 + $0xb8] sm:$0xff]
        %v311 = vld [vmem:[%s286 + $0xc0] sm:$0xff]
        %v312 = vld [vmem:[%s286 + $0xc8] sm:$0xff]
        %v313 = vld [vmem:[%s286 + $0xd0] sm:$0xff]
        %v314 = vld [vmem:[%s286 + $0xd8] sm:$0xff]
        %v315 = vld [vmem:[%s286 + $0xe0] sm:$0xff]
        %v316 = vld [vmem:[%s286 + $0xe8] sm:$0xff]
        %v317 = vld [vmem:[%s286 + $0xf0] sm:$0xff]
        %v318 = vld [vmem:[%s286 + $0xf8] sm:$0xff]
        %s319 = scalar_lea.vmem %s1, 16
        %v320 = vld [vmem:[%s319] sm:$0xff]
        %v321 = vld [vmem:[%s319 + $0x8] sm:$0xff]
        %vm322 = vcmask 130048
        %v324 = vsel %vm322, %v287, 0
        %v327 = vsel %vm322, %v288, 0
        %v330 = vsel %vm322, %v289, 0
        %v333 = vsel %vm322, %v290, 0
        %v336 = vsel %vm322, %v291, 0
        %v339 = vsel %vm322, %v292, 0
        %v342 = vsel %vm322, %v293, 0
        %v345 = vsel %vm322, %v294, 0
        %v348 = vsel %vm322, %v295, 0
        %v351 = vsel %vm322, %v296, 0
        %v354 = vsel %vm322, %v297, 0
        %v357 = vsel %vm322, %v298, 0
        %v360 = vsel %vm322, %v299, 0
        %v363 = vsel %vm322, %v300, 0
        %v366 = vsel %vm322, %v301, 0
        %v369 = vsel %vm322, %v302, 0
        %v372 = vsel %vm322, %v303, 0
        %v375 = vsel %vm322, %v304, 0
        %v378 = vsel %vm322, %v305, 0
        %v381 = vsel %vm322, %v306, 0
        %v384 = vsel %vm322, %v307, 0
        %v387 = vsel %vm322, %v308, 0
        %v390 = vsel %vm322, %v309, 0
        %v393 = vsel %vm322, %v310, 0
        %v396 = vsel %vm322, %v311, 0
        %v399 = vsel %vm322, %v312, 0
        %v402 = vsel %vm322, %v313, 0
        %v405 = vsel %vm322, %v314, 0
        %v408 = vsel %vm322, %v315, 0
        %v411 = vsel %vm322, %v316, 0
        %v414 = vsel %vm322, %v317, 0
        %v417 = vsel %vm322, %v318, 0
        %419 = vmatpush.msra.mxu0 0.0
        %420 = vmatpush.msra.mxu0 0.0
        %421 = vmatpush.msra.mxu0 0.0
        %422 = vmatpush.msra.mxu0 0.0
        %423 = vmatpush.msra.mxu0 0.0
        %424 = vmatpush.msra.mxu0 0.0
        %425 = vmatpush.msra.mxu0 0.0
        %426 = vmatpush.msra.mxu0 0.0
        %427 = vmatpush.msra.mxu0 0.0
        %428 = vmatpush.msra.mxu0 0.0
        %429 = vmatpush.msra.mxu0 0.0
        %430 = vmatpush.msra.mxu0 0.0
        %431 = vmatpush.msra.mxu0 0.0
        %432 = vmatpush.msra.mxu0 0.0
        %433 = vmatpush.msra.mxu0 %v321
        %434 = vmatpush.msra.mxu0 %v320
        %435 = vmatmul.f32.gmra.mxu0 %v324
        %v436 = vpop.f32.mrf.mxu0
        %v437 = vadd.f32 0.0, %v436
        %438 = vmatmul.f32.gmra.mxu0 %v327
        %v439 = vpop.f32.mrf.mxu0
        %v440 = vadd.f32 0.0, %v439
        %441 = vmatmul.f32.gmra.mxu0 %v330
        %v442 = vpop.f32.mrf.mxu0
        %v443 = vadd.f32 0.0, %v442
        %444 = vmatmul.f32.gmra.mxu0 %v333
        %v445 = vpop.f32.mrf.mxu0
        %v446 = vadd.f32 0.0, %v445
        %447 = vmatmul.f32.gmra.mxu0 %v336
        %v448 = vpop.f32.mrf.mxu0
        %v449 = vadd.f32 0.0, %v448
        %450 = vmatmul.f32.gmra.mxu0 %v339
        %v451 = vpop.f32.mrf.mxu0
        %v452 = vadd.f32 0.0, %v451
        %453 = vmatmul.f32.gmra.mxu0 %v342
        %v454 = vpop.f32.mrf.mxu0
        %v455 = vadd.f32 0.0, %v454
        %456 = vmatmul.f32.gmra.mxu0 %v345
        %v457 = vpop.f32.mrf.mxu0
        %v458 = vadd.f32 0.0, %v457
        %459 = vmatmul.f32.gmra.mxu0 %v348
        %v460 = vpop.f32.mrf.mxu0
        %v461 = vadd.f32 0.0, %v460
        %462 = vmatmul.f32.gmra.mxu0 %v351
        %v463 = vpop.f32.mrf.mxu0
        %v464 = vadd.f32 0.0, %v463
        %465 = vmatmul.f32.gmra.mxu0 %v354
        %v466 = vpop.f32.mrf.mxu0
        %v467 = vadd.f32 0.0, %v466
        %468 = vmatmul.f32.gmra.mxu0 %v357
        %v469 = vpop.f32.mrf.mxu0
        %v470 = vadd.f32 0.0, %v469
        %471 = vmatmul.f32.gmra.mxu0 %v360
        %v472 = vpop.f32.mrf.mxu0
        %v473 = vadd.f32 0.0, %v472
        %474 = vmatmul.f32.gmra.mxu0 %v363
        %v475 = vpop.f32.mrf.mxu0
        %v476 = vadd.f32 0.0, %v475
        %477 = vmatmul.f32.gmra.mxu0 %v366
        %v478 = vpop.f32.mrf.mxu0
        %v479 = vadd.f32 0.0, %v478
        %480 = vmatmul.f32.gmra.mxu0 %v369
        %v481 = vpop.f32.mrf.mxu0
        %v482 = vadd.f32 0.0, %v481
        %483 = vmatmul.f32.gmra.mxu0 %v372
        %v484 = vpop.f32.mrf.mxu0
        %v485 = vadd.f32 0.0, %v484
        %486 = vmatmul.f32.gmra.mxu0 %v375
        %v487 = vpop.f32.mrf.mxu0
        %v488 = vadd.f32 0.0, %v487
        %489 = vmatmul.f32.gmra.mxu0 %v378
        %v490 = vpop.f32.mrf.mxu0
        %v491 = vadd.f32 0.0, %v490
        %492 = vmatmul.f32.gmra.mxu0 %v381
        %v493 = vpop.f32.mrf.mxu0
        %v494 = vadd.f32 0.0, %v493
        %495 = vmatmul.f32.gmra.mxu0 %v384
        %v496 = vpop.f32.mrf.mxu0
        %v497 = vadd.f32 0.0, %v496
        %498 = vmatmul.f32.gmra.mxu0 %v387
        %v499 = vpop.f32.mrf.mxu0
        %v500 = vadd.f32 0.0, %v499
        %501 = vmatmul.f32.gmra.mxu0 %v390
        %v502 = vpop.f32.mrf.mxu0
        %v503 = vadd.f32 0.0, %v502
        %504 = vmatmul.f32.gmra.mxu0 %v393
        %v505 = vpop.f32.mrf.mxu0
        %v506 = vadd.f32 0.0, %v505
        %507 = vmatmul.f32.gmra.mxu0 %v396
        %v508 = vpop.f32.mrf.mxu0
        %v509 = vadd.f32 0.0, %v508
        %510 = vmatmul.f32.gmra.mxu0 %v399
        %v511 = vpop.f32.mrf.mxu0
        %v512 = vadd.f32 0.0, %v511
        %513 = vmatmul.f32.gmra.mxu0 %v402
        %v514 = vpop.f32.mrf.mxu0
        %v515 = vadd.f32 0.0, %v514
        %516 = vmatmul.f32.gmra.mxu0 %v405
        %v517 = vpop.f32.mrf.mxu0
        %v518 = vadd.f32 0.0, %v517
        %519 = vmatmul.f32.gmra.mxu0 %v408
        %v520 = vpop.f32.mrf.mxu0
        %v521 = vadd.f32 0.0, %v520
        %522 = vmatmul.f32.gmra.mxu0 %v411
        %v523 = vpop.f32.mrf.mxu0
        %v524 = vadd.f32 0.0, %v523
        %525 = vmatmul.f32.gmra.mxu0 %v414
        %v526 = vpop.f32.mrf.mxu0
        %v527 = vadd.f32 0.0, %v526
        %528 = vmatmul.f32.gmra.mxu0 %v417
        %v529 = vpop.f32.mrf.mxu0
        %v530 = vadd.f32 0.0, %v529
        %531 = vdwg.mxu0
        %v533 = vsel %vm322, %v250, 0
        %v536 = vsel %vm322, %v251, 0
        %v539 = vsel %vm322, %v252, 0
        %v542 = vsel %vm322, %v253, 0
        %v545 = vsel %vm322, %v254, 0
        %v548 = vsel %vm322, %v255, 0
        %v551 = vsel %vm322, %v256, 0
        %v554 = vsel %vm322, %v257, 0
        %v557 = vsel %vm322, %v258, 0
        %v560 = vsel %vm322, %v259, 0
        %v563 = vsel %vm322, %v260, 0
        %v566 = vsel %vm322, %v261, 0
        %v569 = vsel %vm322, %v262, 0
        %v572 = vsel %vm322, %v263, 0
        %v575 = vsel %vm322, %v264, 0
        %v578 = vsel %vm322, %v265, 0
        %v581 = vsel %vm322, %v266, 0
        %v584 = vsel %vm322, %v267, 0
        %v587 = vsel %vm322, %v268, 0
        %v590 = vsel %vm322, %v269, 0
        %v593 = vsel %vm322, %v270, 0
        %v596 = vsel %vm322, %v271, 0
        %v599 = vsel %vm322, %v272, 0
        %v602 = vsel %vm322, %v273, 0
        %v605 = vsel %vm322, %v274, 0
        %v608 = vsel %vm322, %v275, 0
        %v611 = vsel %vm322, %v276, 0
        %v614 = vsel %vm322, %v277, 0
        %v617 = vsel %vm322, %v278, 0
        %v620 = vsel %vm322, %v279, 0
        %v623 = vsel %vm322, %v280, 0
        %v626 = vsel %vm322, %v281, 0
        %628 = vmatpush.msra.mxu0 0.0
        %629 = vmatpush.msra.mxu0 0.0
        %630 = vmatpush.msra.mxu0 0.0
        %631 = vmatpush.msra.mxu0 0.0
        %632 = vmatpush.msra.mxu0 0.0
        %633 = vmatpush.msra.mxu0 0.0
        %634 = vmatpush.msra.mxu0 0.0
        %635 = vmatpush.msra.mxu0 0.0
        %636 = vmatpush.msra.mxu0 0.0
        %637 = vmatpush.msra.mxu0 0.0
        %638 = vmatpush.msra.mxu0 0.0
        %639 = vmatpush.msra.mxu0 0.0
        %640 = vmatpush.msra.mxu0 0.0
        %641 = vmatpush.msra.mxu0 0.0
        %642 = vmatpush.msra.mxu0 %v283
        %643 = vmatpush.msra.mxu0 %v282
        %644 = vmatmul.f32.gmra.mxu0 %v533
        %v645 = vpop.f32.mrf.mxu0
        %v646 = vadd.f32 %v437, %v645
        %647 = vmatmul.f32.gmra.mxu0 %v536
        %v648 = vpop.f32.mrf.mxu0
        %v649 = vadd.f32 %v440, %v648
        %650 = vmatmul.f32.gmra.mxu0 %v539
        %v651 = vpop.f32.mrf.mxu0
        %v652 = vadd.f32 %v443, %v651
        %653 = vmatmul.f32.gmra.mxu0 %v542
        %v654 = vpop.f32.mrf.mxu0
        %v655 = vadd.f32 %v446, %v654
        %656 = vmatmul.f32.gmra.mxu0 %v545
        %v657 = vpop.f32.mrf.mxu0
        %v658 = vadd.f32 %v449, %v657
        %659 = vmatmul.f32.gmra.mxu0 %v548
        %v660 = vpop.f32.mrf.mxu0
        %v661 = vadd.f32 %v452, %v660
        %662 = vmatmul.f32.gmra.mxu0 %v551
        %v663 = vpop.f32.mrf.mxu0
        %v664 = vadd.f32 %v455, %v663
        %665 = vmatmul.f32.gmra.mxu0 %v554
        %v666 = vpop.f32.mrf.mxu0
        %v667 = vadd.f32 %v458, %v666
        %668 = vmatmul.f32.gmra.mxu0 %v557
        %v669 = vpop.f32.mrf.mxu0
        %v670 = vadd.f32 %v461, %v669
        %671 = vmatmul.f32.gmra.mxu0 %v560
        %v672 = vpop.f32.mrf.mxu0
        %v673 = vadd.f32 %v464, %v672
        %674 = vmatmul.f32.gmra.mxu0 %v563
        %v675 = vpop.f32.mrf.mxu0
        %v676 = vadd.f32 %v467, %v675
        %677 = vmatmul.f32.gmra.mxu0 %v566
        %v678 = vpop.f32.mrf.mxu0
        %v679 = vadd.f32 %v470, %v678
        %680 = vmatmul.f32.gmra.mxu0 %v569
        %v681 = vpop.f32.mrf.mxu0
        %v682 = vadd.f32 %v473, %v681
        %683 = vmatmul.f32.gmra.mxu0 %v572
        %v684 = vpop.f32.mrf.mxu0
        %v685 = vadd.f32 %v476, %v684
        %686 = vmatmul.f32.gmra.mxu0 %v575
        %v687 = vpop.f32.mrf.mxu0
        %v688 = vadd.f32 %v479, %v687
        %689 = vmatmul.f32.gmra.mxu0 %v578
        %v690 = vpop.f32.mrf.mxu0
        %v691 = vadd.f32 %v482, %v690
        %692 = vmatmul.f32.gmra.mxu0 %v581
        %v693 = vpop.f32.mrf.mxu0
        %v694 = vadd.f32 %v485, %v693
        %695 = vmatmul.f32.gmra.mxu0 %v584
        %v696 = vpop.f32.mrf.mxu0
        %v697 = vadd.f32 %v488, %v696
        %698 = vmatmul.f32.gmra.mxu0 %v587
        %v699 = vpop.f32.mrf.mxu0
        %v700 = vadd.f32 %v491, %v699
        %701 = vmatmul.f32.gmra.mxu0 %v590
        %v702 = vpop.f32.mrf.mxu0
        %v703 = vadd.f32 %v494, %v702
        %704 = vmatmul.f32.gmra.mxu0 %v593
        %v705 = vpop.f32.mrf.mxu0
        %v706 = vadd.f32 %v497, %v705
        %707 = vmatmul.f32.gmra.mxu0 %v596
        %v708 = vpop.f32.mrf.mxu0
        %v709 = vadd.f32 %v500, %v708
        %710 = vmatmul.f32.gmra.mxu0 %v599
        %v711 = vpop.f32.mrf.mxu0
        %v712 = vadd.f32 %v503, %v711
        %713 = vmatmul.f32.gmra.mxu0 %v602
        %v714 = vpop.f32.mrf.mxu0
        %v715 = vadd.f32 %v506, %v714
        %716 = vmatmul.f32.gmra.mxu0 %v605
        %v717 = vpop.f32.mrf.mxu0
        %v718 = vadd.f32 %v509, %v717
        %719 = vmatmul.f32.gmra.mxu0 %v608
        %v720 = vpop.f32.mrf.mxu0
        %v721 = vadd.f32 %v512, %v720
        %722 = vmatmul.f32.gmra.mxu0 %v611
        %v723 = vpop.f32.mrf.mxu0
        %v724 = vadd.f32 %v515, %v723
        %725 = vmatmul.f32.gmra.mxu0 %v614
        %v726 = vpop.f32.mrf.mxu0
        %v727 = vadd.f32 %v518, %v726
        %728 = vmatmul.f32.gmra.mxu0 %v617
        %v729 = vpop.f32.mrf.mxu0
        %v730 = vadd.f32 %v521, %v729
        %731 = vmatmul.f32.gmra.mxu0 %v620
        %v732 = vpop.f32.mrf.mxu0
        %v733 = vadd.f32 %v524, %v732
        %734 = vmatmul.f32.gmra.mxu0 %v623
        %v735 = vpop.f32.mrf.mxu0
        %v736 = vadd.f32 %v527, %v735
        %737 = vmatmul.f32.gmra.mxu0 %v626
        %v738 = vpop.f32.mrf.mxu0
        %v739 = vadd.f32 %v530, %v738
        %740 = vdwg.mxu0
        %s741 = sadd.s32 %s247, 2
        %s742 = smul.u32 %s741, 16
        %s743 = scalar_lea.vmem %s229, %s742
        %v744 = vld [vmem:[%s743] sm:$0xff]
        %v745 = vld [vmem:[%s743 + $0x8] sm:$0xff]
        %v746 = vld [vmem:[%s743 + $0x10] sm:$0xff]
        %v747 = vld [vmem:[%s743 + $0x18] sm:$0xff]
        %v748 = vld [vmem:[%s743 + $0x20] sm:$0xff]
        %v749 = vld [vmem:[%s743 + $0x28] sm:$0xff]
        %v750 = vld [vmem:[%s743 + $0x30] sm:$0xff]
        %v751 = vld [vmem:[%s743 + $0x38] sm:$0xff]
        %v752 = vld [vmem:[%s743 + $0x40] sm:$0xff]
        %v753 = vld [vmem:[%s743 + $0x48] sm:$0xff]
        %v754 = vld [vmem:[%s743 + $0x50] sm:$0xff]
        %v755 = vld [vmem:[%s743 + $0x58] sm:$0xff]
        %v756 = vld [vmem:[%s743 + $0x60] sm:$0xff]
        %v757 = vld [vmem:[%s743 + $0x68] sm:$0xff]
        %v758 = vld [vmem:[%s743 + $0x70] sm:$0xff]
        %v759 = vld [vmem:[%s743 + $0x78] sm:$0xff]
        %v760 = vld [vmem:[%s743 + $0x80] sm:$0xff]
        %v761 = vld [vmem:[%s743 + $0x88] sm:$0xff]
        %v762 = vld [vmem:[%s743 + $0x90] sm:$0xff]
        %v763 = vld [vmem:[%s743 + $0x98] sm:$0xff]
        %v764 = vld [vmem:[%s743 + $0xa0] sm:$0xff]
        %v765 = vld [vmem:[%s743 + $0xa8] sm:$0xff]
        %v766 = vld [vmem:[%s743 + $0xb0] sm:$0xff]
        %v767 = vld [vmem:[%s743 + $0xb8] sm:$0xff]
        %v768 = vld [vmem:[%s743 + $0xc0] sm:$0xff]
        %v769 = vld [vmem:[%s743 + $0xc8] sm:$0xff]
        %v770 = vld [vmem:[%s743 + $0xd0] sm:$0xff]
        %v771 = vld [vmem:[%s743 + $0xd8] sm:$0xff]
        %v772 = vld [vmem:[%s743 + $0xe0] sm:$0xff]
        %v773 = vld [vmem:[%s743 + $0xe8] sm:$0xff]
        %v774 = vld [vmem:[%s743 + $0xf0] sm:$0xff]
        %v775 = vld [vmem:[%s743 + $0xf8] sm:$0xff]
        %s776 = scalar_lea.vmem %s1, 32
        %v777 = vld [vmem:[%s776] sm:$0xff]
        %v778 = vld [vmem:[%s776 + $0x8] sm:$0xff]
        %v780 = vsel %vm322, %v744, 0
        %v783 = vsel %vm322, %v745, 0
        %v786 = vsel %vm322, %v746, 0
        %v789 = vsel %vm322, %v747, 0
        %v792 = vsel %vm322, %v748, 0
        %v795 = vsel %vm322, %v749, 0
        %v798 = vsel %vm322, %v750, 0
        %v801 = vsel %vm322, %v751, 0
        %v804 = vsel %vm322, %v752, 0
        %v807 = vsel %vm322, %v753, 0
        %v810 = vsel %vm322, %v754, 0
        %v813 = vsel %vm322, %v755, 0
        %v816 = vsel %vm322, %v756, 0
        %v819 = vsel %vm322, %v757, 0
        %v822 = vsel %vm322, %v758, 0
        %v825 = vsel %vm322, %v759, 0
        %v828 = vsel %vm322, %v760, 0
        %v831 = vsel %vm322, %v761, 0
        %v834 = vsel %vm322, %v762, 0
        %v837 = vsel %vm322, %v763, 0
        %v840 = vsel %vm322, %v764, 0
        %v843 = vsel %vm322, %v765, 0
        %v846 = vsel %vm322, %v766, 0
        %v849 = vsel %vm322, %v767, 0
        %v852 = vsel %vm322, %v768, 0
        %v855 = vsel %vm322, %v769, 0
        %v858 = vsel %vm322, %v770, 0
        %v861 = vsel %vm322, %v771, 0
        %v864 = vsel %vm322, %v772, 0
        %v867 = vsel %vm322, %v773, 0
        %v870 = vsel %vm322, %v774, 0
        %v873 = vsel %vm322, %v775, 0
        %875 = vmatpush.msra.mxu0 0.0
        %876 = vmatpush.msra.mxu0 0.0
        %877 = vmatpush.msra.mxu0 0.0
        %878 = vmatpush.msra.mxu0 0.0
        %879 = vmatpush.msra.mxu0 0.0
        %880 = vmatpush.msra.mxu0 0.0
        %881 = vmatpush.msra.mxu0 0.0
        %882 = vmatpush.msra.mxu0 0.0
        %883 = vmatpush.msra.mxu0 0.0
        %884 = vmatpush.msra.mxu0 0.0
        %885 = vmatpush.msra.mxu0 0.0
        %886 = vmatpush.msra.mxu0 0.0
        %887 = vmatpush.msra.mxu0 0.0
        %888 = vmatpush.msra.mxu0 0.0
        %889 = vmatpush.msra.mxu0 %v778
        %890 = vmatpush.msra.mxu0 %v777
        %891 = vmatmul.f32.gmra.mxu0 %v780
        %v892 = vpop.f32.mrf.mxu0
        %v893 = vadd.f32 0.0, %v892
        %894 = vmatmul.f32.gmra.mxu0 %v783
        %v895 = vpop.f32.mrf.mxu0
        %v896 = vadd.f32 0.0, %v895
        %897 = vmatmul.f32.gmra.mxu0 %v786
        %v898 = vpop.f32.mrf.mxu0
        %v899 = vadd.f32 0.0, %v898
        %900 = vmatmul.f32.gmra.mxu0 %v789
        %v901 = vpop.f32.mrf.mxu0
        %v902 = vadd.f32 0.0, %v901
        %903 = vmatmul.f32.gmra.mxu0 %v792
        %v904 = vpop.f32.mrf.mxu0
        %v905 = vadd.f32 0.0, %v904
        %906 = vmatmul.f32.gmra.mxu0 %v795
        %v907 = vpop.f32.mrf.mxu0
        %v908 = vadd.f32 0.0, %v907
        %909 = vmatmul.f32.gmra.mxu0 %v798
        %v910 = vpop.f32.mrf.mxu0
        %v911 = vadd.f32 0.0, %v910
        %912 = vmatmul.f32.gmra.mxu0 %v801
        %v913 = vpop.f32.mrf.mxu0
        %v914 = vadd.f32 0.0, %v913
        %915 = vmatmul.f32.gmra.mxu0 %v804
        %v916 = vpop.f32.mrf.mxu0
        %v917 = vadd.f32 0.0, %v916
        %918 = vmatmul.f32.gmra.mxu0 %v807
        %v919 = vpop.f32.mrf.mxu0
        %v920 = vadd.f32 0.0, %v919
        %921 = vmatmul.f32.gmra.mxu0 %v810
        %v922 = vpop.f32.mrf.mxu0
        %v923 = vadd.f32 0.0, %v922
        %924 = vmatmul.f32.gmra.mxu0 %v813
        %v925 = vpop.f32.mrf.mxu0
        %v926 = vadd.f32 0.0, %v925
        %927 = vmatmul.f32.gmra.mxu0 %v816
        %v928 = vpop.f32.mrf.mxu0
        %v929 = vadd.f32 0.0, %v928
        %930 = vmatmul.f32.gmra.mxu0 %v819
        %v931 = vpop.f32.mrf.mxu0
        %v932 = vadd.f32 0.0, %v931
        %933 = vmatmul.f32.gmra.mxu0 %v822
        %v934 = vpop.f32.mrf.mxu0
        %v935 = vadd.f32 0.0, %v934
        %936 = vmatmul.f32.gmra.mxu0 %v825
        %v937 = vpop.f32.mrf.mxu0
        %v938 = vadd.f32 0.0, %v937
        %939 = vmatmul.f32.gmra.mxu0 %v828
        %v940 = vpop.f32.mrf.mxu0
        %v941 = vadd.f32 0.0, %v940
        %942 = vmatmul.f32.gmra.mxu0 %v831
        %v943 = vpop.f32.mrf.mxu0
        %v944 = vadd.f32 0.0, %v943
        %945 = vmatmul.f32.gmra.mxu0 %v834
        %v946 = vpop.f32.mrf.mxu0
        %v947 = vadd.f32 0.0, %v946
        %948 = vmatmul.f32.gmra.mxu0 %v837
        %v949 = vpop.f32.mrf.mxu0
        %v950 = vadd.f32 0.0, %v949
        %951 = vmatmul.f32.gmra.mxu0 %v840
        %v952 = vpop.f32.mrf.mxu0
        %v953 = vadd.f32 0.0, %v952
        %954 = vmatmul.f32.gmra.mxu0 %v843
        %v955 = vpop.f32.mrf.mxu0
        %v956 = vadd.f32 0.0, %v955
        %957 = vmatmul.f32.gmra.mxu0 %v846
        %v958 = vpop.f32.mrf.mxu0
        %v959 = vadd.f32 0.0, %v958
        %960 = vmatmul.f32.gmra.mxu0 %v849
        %v961 = vpop.f32.mrf.mxu0
        %v962 = vadd.f32 0.0, %v961
        %963 = vmatmul.f32.gmra.mxu0 %v852
        %v964 = vpop.f32.mrf.mxu0
        %v965 = vadd.f32 0.0, %v964
        %966 = vmatmul.f32.gmra.mxu0 %v855
        %v967 = vpop.f32.mrf.mxu0
        %v968 = vadd.f32 0.0, %v967
        %969 = vmatmul.f32.gmra.mxu0 %v858
        %v970 = vpop.f32.mrf.mxu0
        %v971 = vadd.f32 0.0, %v970
        %972 = vmatmul.f32.gmra.mxu0 %v861
        %v973 = vpop.f32.mrf.mxu0
        %v974 = vadd.f32 0.0, %v973
        %975 = vmatmul.f32.gmra.mxu0 %v864
        %v976 = vpop.f32.mrf.mxu0
        %v977 = vadd.f32 0.0, %v976
        %978 = vmatmul.f32.gmra.mxu0 %v867
        %v979 = vpop.f32.mrf.mxu0
        %v980 = vadd.f32 0.0, %v979
        %981 = vmatmul.f32.gmra.mxu0 %v870
        %v982 = vpop.f32.mrf.mxu0
        %v983 = vadd.f32 0.0, %v982
        %984 = vmatmul.f32.gmra.mxu0 %v873
        %v985 = vpop.f32.mrf.mxu0
        %v986 = vadd.f32 0.0, %v985
        %987 = vdwg.mxu0
        %v988 = vadd.f32 %v646, %v893
        %v989 = vadd.f32 %v649, %v896
        %v990 = vadd.f32 %v652, %v899
        %v991 = vadd.f32 %v655, %v902
        %v992 = vadd.f32 %v658, %v905
        %v993 = vadd.f32 %v661, %v908
        %v994 = vadd.f32 %v664, %v911
        %v995 = vadd.f32 %v667, %v914
        %v996 = vadd.f32 %v670, %v917
        %v997 = vadd.f32 %v673, %v920
        %v998 = vadd.f32 %v676, %v923
        %v999 = vadd.f32 %v679, %v926
        %v1000 = vadd.f32 %v682, %v929
        %v1001 = vadd.f32 %v685, %v932
        %v1002 = vadd.f32 %v688, %v935
        %v1003 = vadd.f32 %v691, %v938
        %v1004 = vadd.f32 %v694, %v941
        %v1005 = vadd.f32 %v697, %v944
        %v1006 = vadd.f32 %v700, %v947
        %v1007 = vadd.f32 %v703, %v950
        %v1008 = vadd.f32 %v706, %v953
        %v1009 = vadd.f32 %v709, %v956
        %v1010 = vadd.f32 %v712, %v959
        %v1011 = vadd.f32 %v715, %v962
        %v1012 = vadd.f32 %v718, %v965
        %v1013 = vadd.f32 %v721, %v968
        %v1014 = vadd.f32 %v724, %v971
        %v1015 = vadd.f32 %v727, %v974
        %v1016 = vadd.f32 %v730, %v977
        %v1017 = vadd.f32 %v733, %v980
        %v1018 = vadd.f32 %v736, %v983
        %v1019 = vadd.f32 %v739, %v986
        %vm1020 = vcmask 64512
        %1021 = vst.msk [vmem:[%s238] sm:$0xff] %vm1020, %v988
        %1022 = vst.msk [vmem:[%s238 + $0x8] sm:$0xff] %vm1020, %v989
        %1023 = vst.msk [vmem:[%s238 + $0x10] sm:$0xff] %vm1020, %v990
        %1024 = vst.msk [vmem:[%s238 + $0x18] sm:$0xff] %vm1020, %v991
        %1025 = vst.msk [vmem:[%s238 + $0x20] sm:$0xff] %vm1020, %v992
        %1026 = vst.msk [vmem:[%s238 + $0x28] sm:$0xff] %vm1020, %v993
        %1027 = vst.msk [vmem:[%s238 + $0x30] sm:$0xff] %vm1020, %v994
        %1028 = vst.msk [vmem:[%s238 + $0x38] sm:$0xff] %vm1020, %v995
        %1029 = vst.msk [vmem:[%s238 + $0x40] sm:$0xff] %vm1020, %v996
        %1030 = vst.msk [vmem:[%s238 + $0x48] sm:$0xff] %vm1020, %v997
        %1031 = vst.msk [vmem:[%s238 + $0x50] sm:$0xff] %vm1020, %v998
        %1032 = vst.msk [vmem:[%s238 + $0x58] sm:$0xff] %vm1020, %v999
        %1033 = vst.msk [vmem:[%s238 + $0x60] sm:$0xff] %vm1020, %v1000
        %1034 = vst.msk [vmem:[%s238 + $0x68] sm:$0xff] %vm1020, %v1001
        %1035 = vst.msk [vmem:[%s238 + $0x70] sm:$0xff] %vm1020, %v1002
        %1036 = vst.msk [vmem:[%s238 + $0x78] sm:$0xff] %vm1020, %v1003
        %1037 = vst.msk [vmem:[%s238 + $0x80] sm:$0xff] %vm1020, %v1004
        %1038 = vst.msk [vmem:[%s238 + $0x88] sm:$0xff] %vm1020, %v1005
        %1039 = vst.msk [vmem:[%s238 + $0x90] sm:$0xff] %vm1020, %v1006
        %1040 = vst.msk [vmem:[%s238 + $0x98] sm:$0xff] %vm1020, %v1007
        %1041 = vst.msk [vmem:[%s238 + $0xa0] sm:$0xff] %vm1020, %v1008
        %1042 = vst.msk [vmem:[%s238 + $0xa8] sm:$0xff] %vm1020, %v1009
        %1043 = vst.msk [vmem:[%s238 + $0xb0] sm:$0xff] %vm1020, %v1010
        %1044 = vst.msk [vmem:[%s238 + $0xb8] sm:$0xff] %vm1020, %v1011
        %1045 = vst.msk [vmem:[%s238 + $0xc0] sm:$0xff] %vm1020, %v1012
        %1046 = vst.msk [vmem:[%s238 + $0xc8] sm:$0xff] %vm1020, %v1013
        %1047 = vst.msk [vmem:[%s238 + $0xd0] sm:$0xff] %vm1020, %v1014
        %1048 = vst.msk [vmem:[%s238 + $0xd8] sm:$0xff] %vm1020, %v1015
        %1049 = vst.msk [vmem:[%s238 + $0xe0] sm:$0xff] %vm1020, %v1016
        %1050 = vst.msk [vmem:[%s238 + $0xe8] sm:$0xff] %vm1020, %v1017
        %1051 = vst.msk [vmem:[%s238 + $0xf0] sm:$0xff] %vm1020, %v1018
        %1052 = vst.msk [vmem:[%s238 + $0xf8] sm:$0xff] %vm1020, %v1019
        %v1053 = vld [vmem:[%s218] sm:$0x1]
        %v1054 = vsel %vm1020, %v988, 0.0
        %v1055 = vsel %vm1020, %v989, 0.0
        %v1056 = vadd.f32 %v1054, %v1055
        %v1057 = vsel %vm1020, %v990, 0.0
        %v1058 = vadd.f32 %v1056, %v1057
        %v1059 = vsel %vm1020, %v991, 0.0
        %v1060 = vadd.f32 %v1058, %v1059
        %v1061 = vsel %vm1020, %v992, 0.0
        %v1062 = vadd.f32 %v1060, %v1061
        %v1063 = vsel %vm1020, %v993, 0.0
        %v1064 = vadd.f32 %v1062, %v1063
        %v1065 = vsel %vm1020, %v994, 0.0
        %v1066 = vadd.f32 %v1064, %v1065
        %v1067 = vsel %vm1020, %v995, 0.0
        %v1068 = vadd.f32 %v1066, %v1067
        %v1069 = vsel %vm1020, %v996, 0.0
        %v1070 = vadd.f32 %v1068, %v1069
        %v1071 = vsel %vm1020, %v997, 0.0
        %v1072 = vadd.f32 %v1070, %v1071
        %v1073 = vsel %vm1020, %v998, 0.0
        %v1074 = vadd.f32 %v1072, %v1073
        %v1075 = vsel %vm1020, %v999, 0.0
        %v1076 = vadd.f32 %v1074, %v1075
        %v1077 = vsel %vm1020, %v1000, 0.0
        %v1078 = vadd.f32 %v1076, %v1077
        %v1079 = vsel %vm1020, %v1001, 0.0
        %v1080 = vadd.f32 %v1078, %v1079
        %v1081 = vsel %vm1020, %v1002, 0.0
        %v1082 = vadd.f32 %v1080, %v1081
        %v1083 = vsel %vm1020, %v1003, 0.0
        %v1084 = vadd.f32 %v1082, %v1083
        %v1085 = vsel %vm1020, %v1004, 0.0
        %v1086 = vadd.f32 %v1084, %v1085
        %v1087 = vsel %vm1020, %v1005, 0.0
        %v1088 = vadd.f32 %v1086, %v1087
        %v1089 = vsel %vm1020, %v1006, 0.0
        %v1090 = vadd.f32 %v1088, %v1089
        %v1091 = vsel %vm1020, %v1007, 0.0
        %v1092 = vadd.f32 %v1090, %v1091
        %v1093 = vsel %vm1020, %v1008, 0.0
        %v1094 = vadd.f32 %v1092, %v1093
        %v1095 = vsel %vm1020, %v1009, 0.0
        %v1096 = vadd.f32 %v1094, %v1095
        %v1097 = vsel %vm1020, %v1010, 0.0
        %v1098 = vadd.f32 %v1096, %v1097
        %v1099 = vsel %vm1020, %v1011, 0.0
        %v1100 = vadd.f32 %v1098, %v1099
        %v1101 = vsel %vm1020, %v1012, 0.0
        %v1102 = vadd.f32 %v1100, %v1101
        %v1103 = vsel %vm1020, %v1013, 0.0
        %v1104 = vadd.f32 %v1102, %v1103
        %v1105 = vsel %vm1020, %v1014, 0.0
        %v1106 = vadd.f32 %v1104, %v1105
        %v1107 = vsel %vm1020, %v1015, 0.0
        %v1108 = vadd.f32 %v1106, %v1107
        %v1109 = vsel %vm1020, %v1016, 0.0
        %v1110 = vadd.f32 %v1108, %v1109
        %v1111 = vsel %vm1020, %v1017, 0.0
        %v1112 = vadd.f32 %v1110, %v1111
        %v1113 = vsel %vm1020, %v1018, 0.0
        %v1114 = vadd.f32 %v1112, %v1113
        %v1115 = vsel %vm1020, %v1019, 0.0
        %v1116 = vadd.f32 %v1114, %v1115
        %v1117 = vrot.slane %v1116, 4
        %v1118 = vadd.f32 %v1116, %v1117
        %v1119 = vrot.slane %v1118, 2
        %v1120 = vadd.f32 %v1118, %v1119
        %v1121 = vrot.slane %v1120, 1
        %v1122 = vadd.f32 %v1120, %v1121
        %v1123 = vadd.f32 %v1053, %v1122
        %vm1124 = vcmask 57344
        %1125 = vst.msk [vmem:[%s218] sm:$0x1] %vm1124, %v1123
        %v1126 = vld [vmem:[%s224] sm:$0x1]
        %v1127 = vmul.f32 %v988, %v988
        %v1128 = vmul.f32 %v989, %v989
        %v1129 = vmul.f32 %v990, %v990
        %v1130 = vmul.f32 %v991, %v991
        %v1131 = vmul.f32 %v992, %v992
        %v1132 = vmul.f32 %v993, %v993
        %v1133 = vmul.f32 %v994, %v994
        %v1134 = vmul.f32 %v995, %v995
        %v1135 = vmul.f32 %v996, %v996
        %v1136 = vmul.f32 %v997, %v997
        %v1137 = vmul.f32 %v998, %v998
        %v1138 = vmul.f32 %v999, %v999
        %v1139 = vmul.f32 %v1000, %v1000
        %v1140 = vmul.f32 %v1001, %v1001
        %v1141 = vmul.f32 %v1002, %v1002
        %v1142 = vmul.f32 %v1003, %v1003
        %v1143 = vmul.f32 %v1004, %v1004
        %v1144 = vmul.f32 %v1005, %v1005
        %v1145 = vmul.f32 %v1006, %v1006
        %v1146 = vmul.f32 %v1007, %v1007
        %v1147 = vmul.f32 %v1008, %v1008
        %v1148 = vmul.f32 %v1009, %v1009
        %v1149 = vmul.f32 %v1010, %v1010
        %v1150 = vmul.f32 %v1011, %v1011
        %v1151 = vmul.f32 %v1012, %v1012
        %v1152 = vmul.f32 %v1013, %v1013
        %v1153 = vmul.f32 %v1014, %v1014
        %v1154 = vmul.f32 %v1015, %v1015
        %v1155 = vmul.f32 %v1016, %v1016
        %v1156 = vmul.f32 %v1017, %v1017
        %v1157 = vmul.f32 %v1018, %v1018
        %v1158 = vmul.f32 %v1019, %v1019
        %v1159 = vsel %vm1020, %v1127, 0.0
        %v1160 = vsel %vm1020, %v1128, 0.0
        %v1161 = vadd.f32 %v1159, %v1160
        %v1162 = vsel %vm1020, %v1129, 0.0
        %v1163 = vadd.f32 %v1161, %v1162
        %v1164 = vsel %vm1020, %v1130, 0.0
        %v1165 = vadd.f32 %v1163, %v1164
        %v1166 = vsel %vm1020, %v1131, 0.0
        %v1167 = vadd.f32 %v1165, %v1166
        %v1168 = vsel %vm1020, %v1132, 0.0
        %v1169 = vadd.f32 %v1167, %v1168
        %v1170 = vsel %vm1020, %v1133, 0.0
        %v1171 = vadd.f32 %v1169, %v1170
        %v1172 = vsel %vm1020, %v1134, 0.0
        %v1173 = vadd.f32 %v1171, %v1172
        %v1174 = vsel %vm1020, %v1135, 0.0
        %v1175 = vadd.f32 %v1173, %v1174
        %v1176 = vsel %vm1020, %v1136, 0.0
        %v1177 = vadd.f32 %v1175, %v1176
        %v1178 = vsel %vm1020, %v1137, 0.0
        %v1179 = vadd.f32 %v1177, %v1178
        %v1180 = vsel %vm1020, %v1138, 0.0
        %v1181 = vadd.f32 %v1179, %v1180
        %v1182 = vsel %vm1020, %v1139, 0.0
        %v1183 = vadd.f32 %v1181, %v1182
        %v1184 = vsel %vm1020, %v1140, 0.0
        %v1185 = vadd.f32 %v1183, %v1184
        %v1186 = vsel %vm1020, %v1141, 0.0
        %v1187 = vadd.f32 %v1185, %v1186
        %v1188 = vsel %vm1020, %v1142, 0.0
        %v1189 = vadd.f32 %v1187, %v1188
        %v1190 = vsel %vm1020, %v1143, 0.0
        %v1191 = vadd.f32 %v1189, %v1190
        %v1192 = vsel %vm1020, %v1144, 0.0
        %v1193 = vadd.f32 %v1191, %v1192
        %v1194 = vsel %vm1020, %v1145, 0.0
        %v1195 = vadd.f32 %v1193, %v1194
        %v1196 = vsel %vm1020, %v1146, 0.0
        %v1197 = vadd.f32 %v1195, %v1196
        %v1198 = vsel %vm1020, %v1147, 0.0
        %v1199 = vadd.f32 %v1197, %v1198
        %v1200 = vsel %vm1020, %v1148, 0.0
        %v1201 = vadd.f32 %v1199, %v1200
        %v1202 = vsel %vm1020, %v1149, 0.0
        %v1203 = vadd.f32 %v1201, %v1202
        %v1204 = vsel %vm1020, %v1150, 0.0
        %v1205 = vadd.f32 %v1203, %v1204
        %v1206 = vsel %vm1020, %v1151, 0.0
        %v1207 = vadd.f32 %v1205, %v1206
        %v1208 = vsel %vm1020, %v1152, 0.0
        %v1209 = vadd.f32 %v1207, %v1208
        %v1210 = vsel %vm1020, %v1153, 0.0
        %v1211 = vadd.f32 %v1209, %v1210
        %v1212 = vsel %vm1020, %v1154, 0.0
        %v1213 = vadd.f32 %v1211, %v1212
        %v1214 = vsel %vm1020, %v1155, 0.0
        %v1215 = vadd.f32 %v1213, %v1214
        %v1216 = vsel %vm1020, %v1156, 0.0
        %v1217 = vadd.f32 %v1215, %v1216
        %v1218 = vsel %vm1020, %v1157, 0.0
        %v1219 = vadd.f32 %v1217, %v1218
        %v1220 = vsel %vm1020, %v1158, 0.0
        %v1221 = vadd.f32 %v1219, %v1220
        %v1222 = vrot.slane %v1221, 4
        %v1223 = vadd.f32 %v1221, %v1222
        %v1224 = vrot.slane %v1223, 2
        %v1225 = vadd.f32 %v1223, %v1224
        %v1226 = vrot.slane %v1225, 1
        %v1227 = vadd.f32 %v1225, %v1226
        %v1228 = vadd.f32 %v1126, %v1227
        %1229 = vst.msk [vmem:[%s224] sm:$0x1] %vm1124, %v1228
        %s1230 = smul.u32 32, %s27
        %p1231 = scmp.lt.s32.totalorder %s26, 1
        %s1232 = scalar_select %p1231, %s26, 1
        %p1233 = scmp.lt.s32.totalorder %s1230, 31
        %s1234 = scalar_select %p1233, %s1230, 31
        %s1235 = smul.addr %s1232, 32
        %s1236 = sadd.s32 %s1234, %s1235
        %s1237 = smul.addr %s1236, 8
        %s1238 = scalar_lea.vmem %s2, %s1237
        %s1239 = sand.u32 %s117, 1
        %s1240 = scalar_lea.sflag [#allocation3], %s1239
        %s1241 = sand.u32 %s117, 1
        %s1242 = scalar_lea.vmem [#allocation2], %s1241
        %s1243 = sand.u32 %s143, 1
        %s1244 = scalar_lea.sflag [#allocation5], %s1243
        %s1245 = sand.u32 %s143, 1
        %s1246 = scalar_lea.vmem [#allocation4], %s1245
        // Predicated region
        $region33: #{tpu_custom_call.1} parent=27 // pred_check
          %p1247 = pneg %p101
        $region34: #{tpu_custom_call.1} parent=27 // pred_check_branch
          %1249 = sbr.rel (%p1247) target = $region36
        $region35: #{tpu_custom_call.1} parent=27 // pred_region
          %s1250 = smul.u32 32, %s27
        $region36: #{tpu_custom_call.1} parent=27 // pred_fallthru
          _
        // Predicated region
        $region37: #{tpu_custom_call.1} parent=27 // pred_check
          %p1251 = pneg %p127
        $region38: #{tpu_custom_call.1} parent=27 // pred_check_branch
          %1253 = sbr.rel (%p1251) target = $region40
        $region39: #{tpu_custom_call.1} parent=27 // pred_region
          %1255 = vsyncadd %s1240, 0
          %s1256 = scalar_lea.hbm %s3, %s26
          %s1258 = sshll.u32 %s1242, 4
          %s1259 = int_to_ptr.vmem [resolvable:$true] %s1258
          %s1260 = sshll.u32 %s1256, 4
          %s1261 = int_to_ptr.hbm [resolvable:$true] %s1260
          %1263 = dma.vmem_to_hbm [thread:$0]  %s1259, 16, %s1261, %s1240
        $region40: #{tpu_custom_call.1} parent=27 // pred_fallthru
          _
        // Predicated region
        $region41: #{tpu_custom_call.1} parent=27 // pred_check
          %p1264 = pneg %p153
        $region42: #{tpu_custom_call.1} parent=27 // pred_check_branch
          %1266 = sbr.rel (%p1264) target = $region44
        $region43: #{tpu_custom_call.1} parent=27 // pred_region
          %1268 = vsyncadd %s1244, 0
          %s1269 = scalar_lea.hbm %s4, %s26
          %s1271 = sshll.u32 %s1246, 4
          %s1272 = int_to_ptr.vmem [resolvable:$true] %s1271
          %s1273 = sshll.u32 %s1269, 4
          %s1274 = int_to_ptr.hbm [resolvable:$true] %s1273
          %1276 = dma.vmem_to_hbm [thread:$0]  %s1272, 16, %s1274, %s1244
        $region44: #{tpu_custom_call.1} parent=27 // pred_fallthru
          _
      $region28: #{tpu_custom_call.1} parent=5 // pred_fallthru
        _
      %p1277 = scmp.le.s32.totalorder 2, %s17
      // Predicated region
      $region45: #{tpu_custom_call.1} parent=5 // pred_check
        %p1278 = pneg %p1277
      $region46: #{tpu_custom_call.1} parent=5 // pred_check_branch
        %1280 = sbr.rel (%p1278) target = $region48
      $region47: #{tpu_custom_call.1} parent=5 // pred_region
        %s1281 = ssub.s32 %s17, 2
        // Predicated region
        $region49: #{tpu_custom_call.1} parent=47 // pred_check
          %p1282 = pneg %p107
        $region50: #{tpu_custom_call.1} parent=47 // pred_check_branch
          %1284 = sbr.rel (%p1282) target = $region52
        $region51: #{tpu_custom_call.1} parent=47 // pred_region
          %s1285 = smul.u32 32, %s29
          %p1286 = scmp.lt.s32.totalorder %s28, 1
          %s1287 = scalar_select %p1286, %s28, 1
          %p1288 = scmp.lt.s32.totalorder %s1285, 31
          %s1289 = scalar_select %p1288, %s1285, 31
          %s1290 = smul.addr %s1287, 32
          %s1291 = sadd.s32 %s1289, %s1290
          %s1292 = smul.addr %s1291, 8
          %s1293 = scalar_lea.vmem %s2, %s1292
        $region52: #{tpu_custom_call.1} parent=47 // pred_fallthru
          _
        // Predicated region
        $region53: #{tpu_custom_call.1} parent=47 // pred_check
          %p1294 = pneg %p133
        $region54: #{tpu_custom_call.1} parent=47 // pred_check_branch
          %1296 = sbr.rel (%p1294) target = $region56
        $region55: #{tpu_custom_call.1} parent=47 // pred_region
          %s1297 = sand.u32 %s118, 1
          %s1298 = scalar_lea.sflag [#allocation3], %s1297
          %s1299 = sand.u32 %s118, 1
          %s1300 = scalar_lea.vmem [#allocation2], %s1299
          %1302 = dma.done %s1298, 16
        $region56: #{tpu_custom_call.1} parent=47 // pred_fallthru
          _
        // Predicated region
        $region57: #{tpu_custom_call.1} parent=47 // pred_check
          %p1303 = pneg %p159
        $region58: #{tpu_custom_call.1} parent=47 // pred_check_branch
          %1305 = sbr.rel (%p1303) target = $region60
        $region59: #{tpu_custom_call.1} parent=47 // pred_region
          %s1306 = sand.u32 %s144, 1
          %s1307 = scalar_lea.sflag [#allocation5], %s1306
          %s1308 = sand.u32 %s144, 1
          %s1309 = scalar_lea.vmem [#allocation4], %s1308
          %1311 = dma.done %s1307, 16
        $region60: #{tpu_custom_call.1} parent=47 // pred_fallthru
          _
      $region48: #{tpu_custom_call.1} parent=5 // pred_fallthru
        _
    $region6: #{tpu_custom_call.1} parent=1 // loop_footer
      %s21 = sadd.s32 1, %s17
    $region7: #{tpu_custom_call.1} parent=1 // loop_footer_branch
      %16 = sbr.rel target = $region3
    $region8: #{tpu_custom_call.1} parent=1 // loop_exit
      _
    %1312 = vsyncpa [#allocation3], 1
    %s1313 = scalar_lea.sflag [#allocation3], 1
    %1314 = vsyncpa %s1313, 1
    %1315 = vsyncpa [#allocation5], 1
    %s1316 = scalar_lea.sflag [#allocation5], 1
    %1317 = vsyncpa %s1316, 1

</llo_original>
